<compile_context>
chip_gen: v6e
topology: v6e:2x2x1
jax: 0.10.0
libtpu: 0.0.40
codegen_flags: <defaults>
</compile_context>

<pallas_src>
import functools

import jax
import jax.numpy as jnp
from jax import lax
from jax.experimental import pallas as pl
from jax.experimental.pallas import tpu as pltpu


def _mlp_kernel(x_ref, w_fc_ref, b_fc_ref, w_proj_ref, b_proj_ref, o_ref,
                acc_ref, *, approximate_tanh):
    # x_ref:      (tm, E)
    # w_fc_ref:   (E, ti)     b_fc_ref:   (1, ti)
    # w_proj_ref: (ti, E)     b_proj_ref: (1, E)
    # o_ref:      (tm, E)     acc_ref:    (tm, E) f32 scratch
    k = pl.program_id(1)

    @pl.when(k == 0)
    def _():
        # Fold b_proj into the accumulator init so it is applied exactly once.
        acc_ref[...] = jnp.broadcast_to(
            b_proj_ref[...].astype(jnp.float32), acc_ref.shape)

    # c_fc partial: x @ W_fc[:, k*ti:(k+1)*ti]  (native-dtype MXU inputs,
    # f32 accumulation), then bias + GELU on this (tm, ti) tile in f32.
    h = jnp.dot(x_ref[...], w_fc_ref[...], preferred_element_type=jnp.float32)
    h = h + b_fc_ref[...].astype(jnp.float32)

    if approximate_tanh:
        # "gelu_new" tanh approximation (EUP path, hides under MXU work).
        c = 0.7978845608028654  # sqrt(2/pi)
        h = 0.5 * h * (1.0 + jnp.tanh(c * (h + 0.044715 * h * h * h)))
    else:
        # Exact erf GELU, matching torch.nn.functional.gelu default.
        h = 0.5 * h * (1.0 + lax.erf(h * 0.7071067811865476))

    # c_proj partial: accumulate h @ W_proj[k*ti:(k+1)*ti, :] into the f32 acc.
    acc_ref[...] += jnp.dot(h.astype(w_proj_ref.dtype), w_proj_ref[...],
                            preferred_element_type=jnp.float32)

    @pl.when(k == pl.num_programs(1) - 1)
    def _():
        o_ref[...] = acc_ref[...].astype(o_ref.dtype)


def _vmem_capacity_bytes():
    try:
        return int(pltpu.get_tpu_info().vmem_capacity_bytes)
    except Exception:
        return 64 << 20  # conservative fallback (v7x per-TC size)


def _default_tiles(vmem_cap_bytes):
    if vmem_cap_bytes >= (100 << 20):
        # v5e / v6e: 128 MiB VMEM -> big row tiles (arithmetic intensity).
        return 768, 1024
    # v7x: 64 MiB VMEM per TensorCore.
    return 512, 512


@functools.partial(
    jax.jit,
    static_argnames=("tm", "ti", "approximate_tanh", "vmem_limit",
                     "out_dtype"))
def _codegen_mlp_impl(x2d, w_fc, b_fc2d, w_proj, b_proj2d, *, tm, ti,
                      approximate_tanh, vmem_limit, out_dtype):
    M, E = x2d.shape
    I = w_fc.shape[1]

    # Zero-pad M and I up to tile multiples.  Padded x rows are sliced away;
    # padded I columns/rows are exact (zero W_fc cols + zero b_fc -> gelu
    # output hits zero W_proj rows -> zero contribution).
    Mp = pl.cdiv(M, tm) * tm
    Ip = pl.cdiv(I, ti) * ti
    if Mp != M:
        x2d = jnp.pad(x2d, ((0, Mp - M), (0, 0)))
    if Ip != I:
        w_fc = jnp.pad(w_fc, ((0, 0), (0, Ip - I)))
        b_fc2d = jnp.pad(b_fc2d, ((0, 0), (0, Ip - I)))
        w_proj = jnp.pad(w_proj, ((0, Ip - I), (0, 0)))

    kernel = functools.partial(_mlp_kernel, approximate_tanh=approximate_tanh)

    out = pl.pallas_call(
        kernel,
        out_shape=jax.ShapeDtypeStruct((Mp, E), out_dtype),
        grid_spec=pltpu.PrefetchScalarGridSpec(
            num_scalar_prefetch=0,
            grid=(Mp // tm, Ip // ti),
            in_specs=[
                pl.BlockSpec((tm, E), lambda i, k: (i, 0)),    # x rows tile
                pl.BlockSpec((E, ti), lambda i, k: (0, k)),    # W_fc column slab
                pl.BlockSpec((1, ti), lambda i, k: (0, k)),    # b_fc slab
                pl.BlockSpec((ti, E), lambda i, k: (k, 0)),    # W_proj row slab
                pl.BlockSpec((1, E), lambda i, k: (0, 0)),     # b_proj (full)
            ],
            out_specs=pl.BlockSpec((tm, E), lambda i, k: (i, 0)),
            scratch_shapes=[pltpu.VMEM((tm, E), jnp.float32)],
        ),
        compiler_params=pltpu.CompilerParams(
            dimension_semantics=("parallel", "arbitrary"),
            vmem_limit_bytes=vmem_limit,
        ),
    )(x2d, w_fc, b_fc2d, w_proj, b_proj2d)

    if Mp != M:
        out = out[:M]
    return out


def codegen_mlp(hidden_states, w_fc, b_fc, w_proj, b_proj, *, tm=None, ti=None,
                approximate_tanh=False, compute_dtype=None):
    """hidden_states: [B, S, E]; w_fc: [E, I]; b_fc: [I]; w_proj: [I, E]; b_proj: [E].

    compute_dtype=jnp.bfloat16 enables the production MXU path (x and both
    weight matrices fed to the MXU in bf16, f32 accumulation, output written
    in the caller's dtype).
    """
    B, S, E = hidden_states.shape
    I = w_fc.shape[1]
    M = B * S
    out_dtype = jnp.dtype(hidden_states.dtype)

    if compute_dtype is not None:
        compute_dtype = jnp.dtype(compute_dtype)
        hidden_states = hidden_states.astype(compute_dtype)
        w_fc = w_fc.astype(compute_dtype)
        w_proj = w_proj.astype(compute_dtype)
        # Biases are consumed in f32 inside the kernel; leave them as-is.

    vmem_cap = _vmem_capacity_bytes()
    d_tm, d_ti = _default_tiles(vmem_cap)
    tm = d_tm if tm is None else tm
    ti = d_ti if ti is None else ti

    # Full-dim blocks are always legal; sub-dim blocks must be (8, 128)
    # aligned (tm on the sublane axis, ti on the lane axis).
    tm = M if tm >= M else max(8, (tm // 8) * 8)
    ti = I if ti >= I else max(128, (ti // 128) * 128)

    xb = jnp.dtype(hidden_states.dtype).itemsize
    wb = jnp.dtype(w_fc.dtype).itemsize
    bfb = jnp.dtype(b_fc.dtype).itemsize
    bpb = jnp.dtype(b_proj.dtype).itemsize
    ob = out_dtype.itemsize

    def footprint(tm_, ti_):
        # Double-buffered pipeline tiles + single f32 accumulator.
        return (2 * tm_ * E * xb            # x tile
                + 2 * E * ti_ * wb          # W_fc slab
                + 2 * ti_ * E * wb          # W_proj slab
                + 2 * ti_ * bfb + 2 * E * bpb
                + 2 * tm_ * E * ob          # output tile
                + tm_ * E * 4)              # f32 accumulator

    # Shrink ti first (does not change weight re-streaming / arithmetic
    # intensity), then tm, until the footprint fits the per-chip budget.
    budget = max(vmem_cap - (8 << 20), 16 << 20)
    while footprint(tm, ti) > budget and ti > 256:
        ti = max(256, (ti // 2 // 128) * 128)
    while footprint(tm, ti) > budget and tm > 64:
        tm = max(64, (tm // 2 // 8) * 8)

    vmem_limit = int(min(max(int(footprint(tm, ti) * 1.2) + (4 << 20),
                             32 << 20),
                         vmem_cap - (2 << 20)))

    x2d = hidden_states.reshape(M, E)
    b_fc2d = b_fc.reshape(1, I)
    b_proj2d = b_proj.reshape(1, E)

    out = _codegen_mlp_impl(x2d, w_fc, b_fc2d, w_proj, b_proj2d,
                            tm=tm, ti=ti,
                            approximate_tanh=approximate_tanh,
                            vmem_limit=vmem_limit,
                            out_dtype=out_dtype)
    return out.reshape(B, S, E)


def _reference_mlp(hidden_states, w_fc, b_fc, w_proj, b_proj):
    h = hidden_states @ w_fc + b_fc
    h = 0.5 * h * (1.0 + lax.erf(h / jnp.sqrt(2.0)))
    return h @ w_proj + b_proj


if __name__ == "__main__":
    # Small config: n_embd=32, n_inner=128 (4x), batch=2, seq=8.
    B, S, E, I = 2, 8, 32, 128

    key = jax.random.PRNGKey(0)
    k_x, k_wfc, k_bfc, k_wproj, k_bproj = jax.random.split(key, 5)

    x = jax.random.normal(k_x, (B, S, E), dtype=jnp.float32)
    # Deterministic parameter init (scaled normal, stored as [in, out]).
    w_fc = jax.random.normal(k_wfc, (E, I), dtype=jnp.float32) * 0.02
    b_fc = jax.random.normal(k_bfc, (I,), dtype=jnp.float32) * 0.02
    w_proj = jax.random.normal(k_wproj, (I, E), dtype=jnp.float32) * 0.02
    b_proj = jax.random.normal(k_bproj, (E,), dtype=jnp.float32) * 0.02

    ref = _reference_mlp(x, w_fc, b_fc, w_proj, b_proj)

    # 1) f32 path (matches the PyTorch module numerics, exact erf GELU).
    out = jax.block_until_ready(codegen_mlp(x, w_fc, b_fc, w_proj, b_proj))
    assert out.shape == (B, S, E)
    assert jnp.allclose(out, ref, atol=1e-5, rtol=1e-5), "f32 mismatch"

    # 2) production MXU path: bf16 x/W_fc/W_proj, f32 accumulation.
    out_bf16 = jax.block_until_ready(
        codegen_mlp(x, w_fc, b_fc, w_proj, b_proj,
                    compute_dtype=jnp.bfloat16))
    assert out_bf16.shape == (B, S, E)
    assert jnp.allclose(out_bf16.astype(jnp.float32), ref,
                        atol=3e-2, rtol=3e-2), "bf16 mismatch"

    # 3) ragged M (B*S not a tile multiple) + multi-step I reduction with
    #    explicit small tiles, exercising the padding / accumulator path.
    B2, S2, E2, I2 = 2, 9, 32, 256
    k_x2, k_wfc2, k_bfc2, k_wproj2, k_bproj2 = jax.random.split(
        jax.random.PRNGKey(1), 5)
    x2 = jax.random.normal(k_x2, (B2, S2, E2), dtype=jnp.float32)
    w_fc2 = jax.random.normal(k_wfc2, (E2, I2), dtype=jnp.float32) * 0.02
    b_fc2 = jax.random.normal(k_bfc2, (I2,), dtype=jnp.float32) * 0.02
    w_proj2 = jax.random.normal(k_wproj2, (I2, E2), dtype=jnp.float32) * 0.02
    b_proj2 = jax.random.normal(k_bproj2, (E2,), dtype=jnp.float32) * 0.02

    out2 = jax.block_until_ready(
        codegen_mlp(x2, w_fc2, b_fc2, w_proj2, b_proj2, tm=8, ti=128))
    ref2 = _reference_mlp(x2, w_fc2, b_fc2, w_proj2, b_proj2)
    assert out2.shape == (B2, S2, E2)
    assert jnp.allclose(out2, ref2, atol=1e-5, rtol=1e-5), "ragged mismatch"

    print("KERNEL_OK")
</pallas_src>

<mosaic_0001>
module attributes {stable_mosaic.version = 11 : i64} {
  func.func @_mlp_kernel(%arg0: i32, %arg1: i32, %arg2: memref<16x32xf32, #tpu.memory_space<vmem>>, %arg3: memref<32x128xf32, #tpu.memory_space<vmem>>, %arg4: memref<1x128xf32, #tpu.memory_space<vmem>>, %arg5: memref<128x32xf32, #tpu.memory_space<vmem>>, %arg6: memref<1x32xf32, #tpu.memory_space<vmem>>, %arg7: memref<16x32xf32, #tpu.memory_space<vmem>>, %arg8: memref<16x32xf32, #tpu.memory_space<vmem>>) attributes {dimension_semantics = [#tpu.dimension_semantics<parallel>, #tpu.dimension_semantics<arbitrary>], iteration_bounds = array<i64: 1, 1>, scalar_prefetch = 0 : i64, scratch_operands = 1 : i64, tpu.core_type = #tpu.core_type<tc>, window_params = [{transform_indices = @transform_0, window_bounds = array<i64: 16, 32>}, {transform_indices = @transform_1, window_bounds = array<i64: 32, 128>}, {transform_indices = @transform_2, window_bounds = array<i64: 1, 128>}, {transform_indices = @transform_3, window_bounds = array<i64: 128, 32>}, {pipeline_mode = #tpu.pipeline_mode<synchronous>, transform_indices = @transform_4, window_bounds = array<i64: 1, 32>}, {transform_indices = @transform_5, window_bounds = array<i64: 16, 32>}]} {
    %c0_i32 = arith.constant 0 : i32
    %0 = arith.cmpi eq, %arg1, %c0_i32 : i32
    %1 = arith.extui %0 : i1 to i32
    %c0_i32_0 = arith.constant 0 : i32
    %2 = arith.cmpi ne, %1, %c0_i32_0 : i32
    scf.if %2 {
      %c0_18 = arith.constant 0 : index
      %c0_19 = arith.constant 0 : index
      %25 = vector.load %arg6[%c0_18, %c0_19] : memref<1x32xf32, #tpu.memory_space<vmem>>, vector<1x32xf32>
      %26 = vector.shape_cast %25 : vector<1x32xf32> to vector<1x32xf32>
      %27 = vector.broadcast %26 : vector<1x32xf32> to vector<16x32xf32>
      %c0_20 = arith.constant 0 : index
      %c0_21 = arith.constant 0 : index
      %28 = vector.load %arg8[%c0_20, %c0_21] : memref<16x32xf32, #tpu.memory_space<vmem>>, vector<16x32xf32>
      tpu.vector_store %arg8[%c0_20, %c0_21], %27 {strides = array<i32>} : memref<16x32xf32, #tpu.memory_space<vmem>>, vector<16x32xf32>,
    } else {
    }
    %c0 = arith.constant 0 : index
    %c0_1 = arith.constant 0 : index
    %3 = vector.load %arg2[%c0, %c0_1] : memref<16x32xf32, #tpu.memory_space<vmem>>, vector<16x32xf32>
    %c0_2 = arith.constant 0 : index
    %c0_3 = arith.constant 0 : index
    %4 = vector.load %arg3[%c0_2, %c0_3] : memref<32x128xf32, #tpu.memory_space<vmem>>, vector<32x128xf32>
    %cst = arith.constant dense<0.000000e+00> : vector<16x128xf32>
    %5 = tpu.matmul %3, %4, %cst {dimension_numbers = #tpu.dot_dimension_numbers<[1], [0], [0], [1], [0, 0, 1, 1], [], []>} : vector<16x32xf32>, vector<32x128xf32>, vector<16x128xf32> -> vector<16x128xf32>
    %c0_4 = arith.constant 0 : index
    %c0_5 = arith.constant 0 : index
    %6 = vector.load %arg4[%c0_4, %c0_5] : memref<1x128xf32, #tpu.memory_space<vmem>>, vector<1x128xf32>
    %7 = vector.broadcast %6 : vector<1x128xf32> to vector<16x128xf32>
    %8 = arith.addf %5, %7 : vector<16x128xf32>
    %cst_6 = arith.constant 5.000000e-01 : f32
    %9 = vector.broadcast %cst_6 : f32 to vector<16x128xf32>
    %10 = arith.mulf %9, %8 : vector<16x128xf32>
    %cst_7 = arith.constant 0.707106769 : f32
    %11 = vector.broadcast %cst_7 : f32 to vector<16x128xf32>
    %12 = arith.mulf %8, %11 : vector<16x128xf32>
    %13 = math.erf %12 : vector<16x128xf32>
    %cst_8 = arith.constant 1.000000e+00 : f32
    %14 = vector.broadcast %cst_8 : f32 to vector<16x128xf32>
    %15 = arith.addf %14, %13 : vector<16x128xf32>
    %16 = arith.mulf %10, %15 : vector<16x128xf32>
    %c0_9 = arith.constant 0 : index
    %c0_10 = arith.constant 0 : index
    %17 = vector.load %arg8[%c0_9, %c0_10] : memref<16x32xf32, #tpu.memory_space<vmem>>, vector<16x32xf32>
    %c0_11 = arith.constant 0 : index
    %c0_12 = arith.constant 0 : index
    %18 = vector.load %arg5[%c0_11, %c0_12] : memref<128x32xf32, #tpu.memory_space<vmem>>, vector<128x32xf32>
    %cst_13 = arith.constant dense<0.000000e+00> : vector<16x32xf32>
    %19 = tpu.matmul %16, %18, %cst_13 {dimension_numbers = #tpu.dot_dimension_numbers<[1], [0], [0], [1], [0, 0, 1, 1], [], []>} : vector<16x128xf32>, vector<128x32xf32>, vector<16x32xf32> -> vector<16x32xf32>
    %20 = arith.addf %17, %19 : vector<16x32xf32>
    %c0_14 = arith.constant 0 : index
    %c0_15 = arith.constant 0 : index
    %21 = vector.load %arg8[%c0_14, %c0_15] : memref<16x32xf32, #tpu.memory_space<vmem>>, vector<16x32xf32>
    tpu.vector_store %arg8[%c0_14, %c0_15], %20 {strides = array<i32>} : memref<16x32xf32, #tpu.memory_space<vmem>>, vector<16x32xf32>,
    %c0_i32_16 = arith.constant 0 : i32
    %22 = arith.cmpi eq, %arg1, %c0_i32_16 : i32
    %23 = arith.extui %22 : i1 to i32
    %c0_i32_17 = arith.constant 0 : i32
    %24 = arith.cmpi ne, %23, %c0_i32_17 : i32
    scf.if %24 {
      %c0_18 = arith.constant 0 : index
      %c0_19 = arith.constant 0 : index
      %25 = vector.load %arg8[%c0_18, %c0_19] : memref<16x32xf32, #tpu.memory_space<vmem>>, vector<16x32xf32>
      %c0_20 = arith.constant 0 : index
      %c0_21 = arith.constant 0 : index
      %26 = vector.load %arg7[%c0_20, %c0_21] : memref<16x32xf32, #tpu.memory_space<vmem>>, vector<16x32xf32>
      tpu.vector_store %arg7[%c0_20, %c0_21], %25 {strides = array<i32>} : memref<16x32xf32, #tpu.memory_space<vmem>>, vector<16x32xf32>,
    } else {
    }
    return
  }
  func.func @transform_0(%arg0: i32, %arg1: i32) -> (i32, i32) {
    %c0_i32 = arith.constant 0 : i32
    %c0_i32_0 = arith.constant 0 : i32
    return %arg0, %c0_i32 : i32, i32
  }
  func.func @transform_1(%arg0: i32, %arg1: i32) -> (i32, i32) {
    %c0_i32 = arith.constant 0 : i32
    %c0_i32_0 = arith.constant 0 : i32
    return %c0_i32, %arg1 : i32, i32
  }
  func.func @transform_2(%arg0: i32, %arg1: i32) -> (i32, i32) {
    %c0_i32 = arith.constant 0 : i32
    %c0_i32_0 = arith.constant 0 : i32
    return %c0_i32, %arg1 : i32, i32
  }
  func.func @transform_3(%arg0: i32, %arg1: i32) -> (i32, i32) {
    %c0_i32 = arith.constant 0 : i32
    %c0_i32_0 = arith.constant 0 : i32
    return %arg1, %c0_i32 : i32, i32
  }
  func.func @transform_4(%arg0: i32, %arg1: i32) -> (i32, i32) {
    %c0_i32 = arith.constant 0 : i32
    %c0_i32_0 = arith.constant 0 : i32
    %c0_i32_1 = arith.constant 0 : i32
    return %c0_i32, %c0_i32_0 : i32, i32
  }
  func.func @transform_5(%arg0: i32, %arg1: i32) -> (i32, i32) {
    %c0_i32 = arith.constant 0 : i32
    %c0_i32_0 = arith.constant 0 : i32
    return %arg0, %c0_i32 : i32, i32
  }
}

</mosaic_0001>

<llo_original>
// kernel: _codegen_mlp_impl.1
$region0: #{_codegen_mlp_impl.1}
  #allocation0 [shape = 'u32[]', space=smem, size = 0x4, offset = 0x4, fixed_abs, tag = 'smem constant byte address 0x4 - core index']
  #allocation1 [shape = 'u32[144,128]{1,0:T(1,128)}', space=vmem, size = 0x12000, scoped, tag = 'internal scratch']
  #allocation2 [shape = 'f32[16,32]{1,0:T(8,128)}', space=vmem, size = 0x2000, scoped, tag = 'scratch operand']
  %s0 = inlined_call_operand.vmem [shape: f32[16,32], index: 0, kind: input, shape index: {}]
  %s1 = inlined_call_operand.vmem [shape: f32[32,128], index: 1, kind: input, shape index: {}]
  %s2 = inlined_call_operand.vmem [shape: f32[1,128], index: 2, kind: input, shape index: {}]
  %s3 = inlined_call_operand.vmem [shape: f32[128,32], index: 3, kind: input, shape index: {}]
  %s4 = inlined_call_operand.vmem [shape: f32[1,32], index: 4, kind: input, shape index: {}]
  %s5 = inlined_call_operand.hbm [shape: f32[16,32], index: 5, kind: output, shape index: {}]
  %s6 = sld [smem:[#allocation0]]
  $region38: #{_codegen_mlp_impl.1} parent=0
    _
  %s8 = ssub.s32 1, %s6
  %s9 = scalar_select 0, %s8, %s6
  $region1: #{_codegen_mlp_impl.1} parent=0
    #allocation3 [shape = 'u8[8192]{0}', space=vmem, size = 0x2000, scoped, tag = 'output window, operand 0, single buffered']
    #allocation4 [shape = 's32[1]{0}', space=sflag, size = 0x4, scoped, tag = 'scoped memory for _codegen_mlp_impl.1']
    %10 = vsyncpa [#allocation4], 0
    // Predicated region
    $region2: #{_codegen_mlp_impl.1} parent=1 // pred_check
      _
    $region3: #{_codegen_mlp_impl.1} parent=1 // pred_check_branch
      %12 = sbr.rel (0) target = $region5
    $region4: #{_codegen_mlp_impl.1} parent=1 // pred_region
      _
    $region5: #{_codegen_mlp_impl.1} parent=1 // pred_fallthru
      _
    // Predicated region
    $region6: #{_codegen_mlp_impl.1} parent=1 // pred_check
      _
    $region7: #{_codegen_mlp_impl.1} parent=1 // pred_check_branch
      %14 = sbr.rel (0) target = $region9
    $region8: #{_codegen_mlp_impl.1} parent=1 // pred_region
      _
    $region9: #{_codegen_mlp_impl.1} parent=1 // pred_fallthru
      _
    // Predicated region
    $region10: #{_codegen_mlp_impl.1} parent=1 // pred_check
      _
    $region11: #{_codegen_mlp_impl.1} parent=1 // pred_check_branch
      %16 = sbr.rel (0) target = $region13
    $region12: #{_codegen_mlp_impl.1} parent=1 // pred_region
      _
    $region13: #{_codegen_mlp_impl.1} parent=1 // pred_fallthru
      _
    // Predicated region
    $region14: #{_codegen_mlp_impl.1} parent=1 // pred_check
      _
    $region15: #{_codegen_mlp_impl.1} parent=1 // pred_check_branch
      %18 = sbr.rel (0) target = $region17
    $region16: #{_codegen_mlp_impl.1} parent=1 // pred_region
      _
    $region17: #{_codegen_mlp_impl.1} parent=1 // pred_fallthru
      _
    // Predicated region
    $region18: #{_codegen_mlp_impl.1} parent=1 // pred_check
      _
    $region19: #{_codegen_mlp_impl.1} parent=1 // pred_check_branch
      %20 = sbr.rel (0) target = $region21
    $region20: #{_codegen_mlp_impl.1} parent=1 // pred_region
      _
    $region21: #{_codegen_mlp_impl.1} parent=1 // pred_fallthru
      _
    %p21 = scmp.eq.s32.totalorder 0, 0
    // Predicated region
    $region22: #{_codegen_mlp_impl.1} parent=1 // pred_check
      %p22 = pneg %p21
    $region23: #{_codegen_mlp_impl.1} parent=1 // pred_check_branch
      %24 = sbr.rel (%p22) target = $region25
    $region24: #{_codegen_mlp_impl.1} parent=1 // pred_region
      %v25 = vld [vmem:[%s4] sm:$0x1]
      %v27 = vlaneseq
      %v28 = vshrl.u32 %v27, 7
      %v29 = vsub.s32 0, %v28
      %v30 = vrot.slane %v25, %v29
      %vm32 = vcmask 261120
      %33 = vst.msk [vmem:[#allocation2] sm:$0xff] %vm32, %v30
      %34 = vst.msk [vmem:[#allocation2 + $0x8] sm:$0xff] %vm32, %v30
    $region25: #{_codegen_mlp_impl.1} parent=1 // pred_fallthru
      _
    %v35 = vld [vmem:[%s0] sm:$0xff]
    %v36 = vld [vmem:[%s0 + $0x8] sm:$0xff]
    %v37 = vld [vmem:[%s1] sm:$0xff]
    %v38 = vld [vmem:[%s1 + $0x8] sm:$0xff]
    %v39 = vld [vmem:[%s1 + $0x10] sm:$0xff]
    %v40 = vld [vmem:[%s1 + $0x18] sm:$0xff]
    %v41 = vld [vmem:[%s2] sm:$0x1]
    %v43 = vlaneseq
    %v44 = vshrl.u32 %v43, 7
    %v45 = vsub.s32 0, %v44
    %v46 = vrot.slane %v41, %v45
    %vm48 = vcmask 261120
    %v50 = vsel %vm48, %v35, 0
    %v53 = vsel %vm48, %v36, 0
    %55 = vmatprep.subr.mxu0 0.0
    %56 = vmatpush1.msra.mxu0 0.0
    %57 = vmatprep.subr.mxu0 0.0
    %58 = vmatpush1.msra.mxu0 0.0
    %59 = vmatprep.subr.mxu0 0.0
    %60 = vmatpush1.msra.mxu0 0.0
    %61 = vmatprep.subr.mxu0 0.0
    %62 = vmatpush1.msra.mxu0 0.0
    %63 = vmatprep.subr.mxu0 0.0
    %64 = vmatpush1.msra.mxu0 0.0
    %65 = vmatprep.subr.mxu0 0.0
    %66 = vmatpush1.msra.mxu0 0.0
    %67 = vmatprep.subr.mxu0 0.0
    %68 = vmatpush1.msra.mxu0 0.0
    %69 = vmatprep.subr.mxu0 0.0
    %70 = vmatpush1.msra.mxu0 0.0
    %71 = vmatprep.subr.mxu0 0.0
    %72 = vmatpush1.msra.mxu0 0.0
    %73 = vmatprep.subr.mxu0 0.0
    %74 = vmatpush1.msra.mxu0 0.0
    %75 = vmatprep.subr.mxu0 0.0
    %76 = vmatpush1.msra.mxu0 0.0
    %77 = vmatprep.subr.mxu0 0.0
    %78 = vmatpush1.msra.mxu0 0.0
    %79 = vmatprep.subr.mxu0 0.0
    %80 = vmatpush1.msra.mxu0 %v40
    %81 = vmatprep.subr.mxu0 0.0
    %82 = vmatpush1.msra.mxu0 %v39
    %83 = vmatprep.subr.mxu0 0.0
    %84 = vmatpush1.msra.mxu0 %v38
    %85 = vmatprep.subr.mxu0 0.0
    %86 = vmatpush1.msra.mxu0 %v37
    %87 = vmatprep.subr.mxu0 0.0
    %88 = vmatpush2.msra.mxu0 0.0
    %89 = vmatprep.subr.mxu0 0.0
    %90 = vmatpush2.msra.mxu0 0.0
    %91 = vmatprep.subr.mxu0 0.0
    %92 = vmatpush2.msra.mxu0 0.0
    %93 = vmatprep.subr.mxu0 0.0
    %94 = vmatpush2.msra.mxu0 0.0
    %95 = vmatprep.subr.mxu0 0.0
    %96 = vmatpush2.msra.mxu0 0.0
    %97 = vmatprep.subr.mxu0 0.0
    %98 = vmatpush2.msra.mxu0 0.0
    %99 = vmatprep.subr.mxu0 0.0
    %100 = vmatpush2.msra.mxu0 0.0
    %101 = vmatprep.subr.mxu0 0.0
    %102 = vmatpush2.msra.mxu0 0.0
    %103 = vmatprep.subr.mxu0 0.0
    %104 = vmatpush2.msra.mxu0 0.0
    %105 = vmatprep.subr.mxu0 0.0
    %106 = vmatpush2.msra.mxu0 0.0
    %107 = vmatprep.subr.mxu0 0.0
    %108 = vmatpush2.msra.mxu0 0.0
    %109 = vmatprep.subr.mxu0 0.0
    %110 = vmatpush2.msra.mxu0 0.0
    %111 = vmatprep.subr.mxu0 0.0
    %112 = vmatpush2.msra.mxu0 0.0
    %113 = vmatprep.subr.mxu0 0.0
    %114 = vmatpush2.msra.mxu0 0.0
    %115 = vmatprep.subr.mxu0 0.0
    %116 = vmatpush2.msra.mxu0 0.0
    %117 = vmatprep.subr.mxu0 0.0
    %118 = vmatpush2.msra.mxu0 0.0
    %119 = vmatprep.mubr.f32.mxu0 0.0
    %120 = vmatmul.mubr.f32.gmra.mxu0 %v50
    %v121 = vpop.f32.mrf.mxu0
    %v122 = vadd.f32 %v46, %v121
    %v123 = vpop.f32.mrf.mxu0
    %124 = vmatprep.mubr.f32.mxu0 0.0
    %125 = vmatmul.mubr.f32.gmra.mxu0 %v53
    %v126 = vpop.f32.mrf.mxu0
    %v127 = vadd.f32 %v46, %v126
    %v128 = vpop.f32.mrf.mxu0
    %129 = vdwg.mxu0
    %v130 = vmul.f32 %v122, 0.5
    %v131 = vmul.f32 %v127, 0.5
    %v132 = vmul.f32 %v122, 0.70710677
    %v133 = vmul.f32 %v127, 0.70710677
    %v134 = verf.f32.pop %v132
    %v135 = verf.f32.pop %v133
    %v136 = vadd.f32 %v134, 1.0
    %v137 = vadd.f32 %v135, 1.0
    %v138 = vmul.f32 %v130, %v136
    %v139 = vmul.f32 %v131, %v137
    %v140 = vld [vmem:[#allocation2] sm:$0xff]
    %v141 = vld [vmem:[#allocation2 + $0x8] sm:$0xff]
    %v142 = vld [vmem:[%s3] sm:$0xff]
    %v143 = vld [vmem:[%s3 + $0x8] sm:$0xff]
    %v144 = vld [vmem:[%s3 + $0x10] sm:$0xff]
    %v145 = vld [vmem:[%s3 + $0x18] sm:$0xff]
    %v146 = vld [vmem:[%s3 + $0x20] sm:$0xff]
    %v147 = vld [vmem:[%s3 + $0x28] sm:$0xff]
    %v148 = vld [vmem:[%s3 + $0x30] sm:$0xff]
    %v149 = vld [vmem:[%s3 + $0x38] sm:$0xff]
    %v150 = vld [vmem:[%s3 + $0x40] sm:$0xff]
    %v151 = vld [vmem:[%s3 + $0x48] sm:$0xff]
    %v152 = vld [vmem:[%s3 + $0x50] sm:$0xff]
    %v153 = vld [vmem:[%s3 + $0x58] sm:$0xff]
    %v154 = vld [vmem:[%s3 + $0x60] sm:$0xff]
    %v155 = vld [vmem:[%s3 + $0x68] sm:$0xff]
    %v156 = vld [vmem:[%s3 + $0x70] sm:$0xff]
    %v157 = vld [vmem:[%s3 + $0x78] sm:$0xff]
    %158 = vmatprep.subr.mxu0 0.0
    %159 = vmatpush1.msra.mxu0 %v157
    %160 = vmatprep.subr.mxu0 0.0
    %161 = vmatpush1.msra.mxu0 %v156
    %162 = vmatprep.subr.mxu0 0.0
    %163 = vmatpush1.msra.mxu0 %v155
    %164 = vmatprep.subr.mxu0 0.0
    %165 = vmatpush1.msra.mxu0 %v154
    %166 = vmatprep.subr.mxu0 0.0
    %167 = vmatpush1.msra.mxu0 %v153
    %168 = vmatprep.subr.mxu0 0.0
    %169 = vmatpush1.msra.mxu0 %v152
    %170 = vmatprep.subr.mxu0 0.0
    %171 = vmatpush1.msra.mxu0 %v151
    %172 = vmatprep.subr.mxu0 0.0
    %173 = vmatpush1.msra.mxu0 %v150
    %174 = vmatprep.subr.mxu0 0.0
    %175 = vmatpush1.msra.mxu0 %v149
    %176 = vmatprep.subr.mxu0 0.0
    %177 = vmatpush1.msra.mxu0 %v148
    %178 = vmatprep.subr.mxu0 0.0
    %179 = vmatpush1.msra.mxu0 %v147
    %180 = vmatprep.subr.mxu0 0.0
    %181 = vmatpush1.msra.mxu0 %v146
    %182 = vmatprep.subr.mxu0 0.0
    %183 = vmatpush1.msra.mxu0 %v145
    %184 = vmatprep.subr.mxu0 0.0
    %185 = vmatpush1.msra.mxu0 %v144
    %186 = vmatprep.subr.mxu0 0.0
    %187 = vmatpush1.msra.mxu0 %v143
    %188 = vmatprep.subr.mxu0 0.0
    %189 = vmatpush1.msra.mxu0 %v142
    %190 = vmatprep.subr.mxu0 0.0
    %191 = vmatpush2.msra.mxu0 0.0
    %192 = vmatprep.subr.mxu0 0.0
    %193 = vmatpush2.msra.mxu0 0.0
    %194 = vmatprep.subr.mxu0 0.0
    %195 = vmatpush2.msra.mxu0 0.0
    %196 = vmatprep.subr.mxu0 0.0
    %197 = vmatpush2.msra.mxu0 0.0
    %198 = vmatprep.subr.mxu0 0.0
    %199 = vmatpush2.msra.mxu0 0.0
    %200 = vmatprep.subr.mxu0 0.0
    %201 = vmatpush2.msra.mxu0 0.0
    %202 = vmatprep.subr.mxu0 0.0
    %203 = vmatpush2.msra.mxu0 0.0
    %204 = vmatprep.subr.mxu0 0.0
    %205 = vmatpush2.msra.mxu0 0.0
    %206 = vmatprep.subr.mxu0 0.0
    %207 = vmatpush2.msra.mxu0 0.0
    %208 = vmatprep.subr.mxu0 0.0
    %209 = vmatpush2.msra.mxu0 0.0
    %210 = vmatprep.subr.mxu0 0.0
    %211 = vmatpush2.msra.mxu0 0.0
    %212 = vmatprep.subr.mxu0 0.0
    %213 = vmatpush2.msra.mxu0 0.0
    %214 = vmatprep.subr.mxu0 0.0
    %215 = vmatpush2.msra.mxu0 0.0
    %216 = vmatprep.subr.mxu0 0.0
    %217 = vmatpush2.msra.mxu0 0.0
    %218 = vmatprep.subr.mxu0 0.0
    %219 = vmatpush2.msra.mxu0 0.0
    %220 = vmatprep.subr.mxu0 0.0
    %221 = vmatpush2.msra.mxu0 0.0
    %222 = vmatprep.mubr.f32.mxu0 0.0
    %223 = vmatmul.mubr.f32.gmra.mxu0 %v138
    %v224 = vpop.f32.mrf.mxu0
    %v225 = vadd.f32 0.0, %v224
    %v226 = vpop.f32.mrf.mxu0
    %227 = vmatprep.mubr.f32.mxu0 0.0
    %228 = vmatmul.mubr.f32.gmra.mxu0 %v139
    %v229 = vpop.f32.mrf.mxu0
    %v230 = vadd.f32 0.0, %v229
    %v231 = vpop.f32.mrf.mxu0
    %232 = vdwg.mxu0
    %v233 = vadd.f32 %v140, %v225
    %v234 = vadd.f32 %v141, %v230
    %235 = vst.msk [vmem:[#allocation2] sm:$0xff] %vm48, %v233
    %236 = vst.msk [vmem:[#allocation2 + $0x8] sm:$0xff] %vm48, %v234
    // Predicated region
    $region26: #{_codegen_mlp_impl.1} parent=1 // pred_check
      %p237 = pneg %p21
    $region27: #{_codegen_mlp_impl.1} parent=1 // pred_check_branch
      %239 = sbr.rel (%p237) target = $region29
    $region28: #{_codegen_mlp_impl.1} parent=1 // pred_region
      %v240 = vld [vmem:[#allocation2] sm:$0xff]
      %v241 = vld [vmem:[#allocation2 + $0x8] sm:$0xff]
      %242 = vst.msk [vmem:[#allocation3] sm:$0xff] %vm48, %v240
      %243 = vst.msk [vmem:[#allocation3 + $0x8] sm:$0xff] %vm48, %v241
    $region29: #{_codegen_mlp_impl.1} parent=1 // pred_fallthru
      _
    // Predicated region
    $region30: #{_codegen_mlp_impl.1} parent=1 // pred_check
      _
    $region31: #{_codegen_mlp_impl.1} parent=1 // pred_check_branch
      %245 = sbr.rel (0) target = $region33
    $region32: #{_codegen_mlp_impl.1} parent=1 // pred_region
      %s247 = ssub.s32 256, 256
      %248 = vsyncadd [#allocation4], %s247
      %s249 = sshll.u32 [#allocation3], 4
      %s250 = int_to_ptr.vmem [resolvable:$true] %s249
      %255 = dma.vmem_to_hbm [thread:$0]  %s250, 256, %s5, [#allocation4], 128, 128, 8
    $region33: #{_codegen_mlp_impl.1} parent=1 // pred_fallthru
      _
    // Predicated region
    $region34: #{_codegen_mlp_impl.1} parent=1 // pred_check
      _
    $region35: #{_codegen_mlp_impl.1} parent=1 // pred_check_branch
      %257 = sbr.rel (0) target = $region37
    $region36: #{_codegen_mlp_impl.1} parent=1 // pred_region
      %258 = dma.done [#allocation4], 256
    $region37: #{_codegen_mlp_impl.1} parent=1 // pred_fallthru
      _
    %259 = vsyncpa [#allocation4], 1

</llo_original>
